<compile_context>
chip_gen: v7x
topology: tpu7x:2x2x1
jax: 0.10.0
libtpu: 0.0.40
codegen_flags: <defaults>
</compile_context>

<pallas_src>
import functools

import jax
import jax.numpy as jnp
import numpy as np
from jax.experimental import pallas as pl
from jax.experimental.pallas import tpu as pltpu

BN_EPS = 1e-5
PREFERRED_TILE = 512   # rows per grid step for large batches (multiple of 8 & 128)


def _round_up(n, m):
    return ((n + m - 1) // m) * m


def _tile_for_batch(B):
    """Pick (tile_rows, padded_batch).  Small B -> one sublane-aligned tile;
    larger B -> >=2 steps (v7x megacore) with up to PREFERRED_TILE rows/step."""
    Bp = _round_up(max(B, 1), 8)
    if Bp <= 16:
        return Bp, Bp
    tile = min(PREFERRED_TILE, _round_up(pl.cdiv(Bp, 2), 8))
    return tile, _round_up(Bp, tile)


def _vae_kernel(
    x_ref, eps_ref,
    w1_ref, b1_ref,      # encoder block 1 (BN folded in)
    w2_ref, b2_ref,      # encoder block 2 (BN folded in)
    wh_ref, bh_ref,      # fused mu|logvar head
    wd1_ref, bd1_ref,    # decoder block 1 (BN folded in)
    wd2_ref, bd2_ref,    # decoder final linear
    out_ref,             # packed bf16 [tile, round_up(input_dim + 3*l2, 128)]
):
    def linear(h, w_ref, b_ref):
        # bf16 x bf16 matmul on the MXU, f32 accumulation, f32 bias add.
        return (
            jnp.dot(h.astype(jnp.bfloat16), w_ref[...],
                    preferred_element_type=jnp.float32)
            + b_ref[...]
        )

    l2 = eps_ref.shape[-1]
    x = x_ref[...]                      # already bf16 (cast once in wrapper)

    # ---- encoder: (Linear+BN) -> ReLU -> [Dropout=identity] -> (Linear+BN) -> ReLU
    h = jnp.maximum(linear(x, w1_ref, b1_ref), 0.0)
    h = jnp.maximum(linear(h, w2_ref, b2_ref), 0.0)

    # ---- fused latent heads: one matmul produces [B, 2*l2] = [mu | logvar]
    heads = linear(h, wh_ref, bh_ref)
    mu = heads[:, :l2]
    logvar = heads[:, l2:2 * l2]

    # ---- reparameterize: z = mu + eps * exp(0.5 * logvar)   (f32 epilogue)
    z = mu + eps_ref[...] * jnp.exp(0.5 * logvar)

    # ---- decoder: (Linear+BN) -> ReLU -> [Dropout=identity] -> Linear
    d = jnp.maximum(linear(z, wd1_ref, bd1_ref), 0.0)
    recon = linear(d, wd2_ref, bd2_ref)

    # ---- single lane-dense packed store (zero-padded to a multiple of 128 lanes)
    pieces = [recon, mu, logvar, z]
    real_w = recon.shape[-1] + 3 * l2
    pad_cols = out_ref.shape[-1] - real_w          # static Python int
    if pad_cols:
        pieces.append(jnp.zeros((recon.shape[0], pad_cols), jnp.float32))
    out_ref[...] = jnp.concatenate(pieces, axis=1).astype(out_ref.dtype)


def make_params(key, input_dim, latent_dims):
    """Deterministic synthetic parameters (PyTorch-style, weights pre-transposed to [in, out])."""
    assert len(latent_dims) == 2, "this script instantiates latent_dims of length 2"
    l1, l2 = latent_dims

    def lin(k, fan_in, fan_out):
        k1, k2 = jax.random.split(k)
        bound = 1.0 / np.sqrt(fan_in)
        w = jax.random.uniform(k1, (fan_in, fan_out), jnp.float32, -bound, bound)  # W^T
        b = jax.random.uniform(k2, (1, fan_out), jnp.float32, -bound, bound)
        return w, b

    def bn(dim):
        return (jnp.ones((1, dim), jnp.float32),   # gamma
                jnp.zeros((1, dim), jnp.float32),  # beta
                jnp.zeros((1, dim), jnp.float32),  # running_mean
                jnp.ones((1, dim), jnp.float32))   # running_var

    keys = jax.random.split(key, 6)
    we1, be1 = lin(keys[0], input_dim, l1)
    we2, be2 = lin(keys[1], l1, l2)
    wmu, bmu = lin(keys[2], l2, l2)
    wlv, blv = lin(keys[3], l2, l2)
    wd1, bd1 = lin(keys[4], l2, l1)
    wd2, bd2 = lin(keys[5], l1, input_dim)

    g1, b1, m1, v1 = bn(l1)
    g2, b2, m2, v2 = bn(l2)
    gd1, bd1b, md1, vd1 = bn(l1)

    return (we1, be1, g1, b1, m1, v1,
            we2, be2, g2, b2, m2, v2,
            wmu, bmu, wlv, blv,
            wd1, bd1, gd1, bd1b, md1, vd1,
            wd2, bd2)


def prepare_kernel_params(params):
    """Host-side, one-time: fold BN into Linear, fuse mu/logvar, cast weights to bf16."""
    (we1, be1, g1, b1, m1, v1,
     we2, be2, g2, b2, m2, v2,
     wmu, bmu, wlv, blv,
     wd1, bd1, gd1, bd1b, md1, vd1,
     wd2, bd2) = params

    def fold(w, b, g, beta, m, v):
        scale = g * jax.lax.rsqrt(v + BN_EPS)                       # [1, out]
        w_f = (w * scale).astype(jnp.bfloat16)                      # [in, out]
        b_f = ((b - m) * scale + beta).astype(jnp.float32)          # [1, out]
        return w_f, b_f

    w1, b1f = fold(we1, be1, g1, b1, m1, v1)
    w2, b2f = fold(we2, be2, g2, b2, m2, v2)
    wh = jnp.concatenate([wmu, wlv], axis=1).astype(jnp.bfloat16)   # [l2, 2*l2]
    bh = jnp.concatenate([bmu, blv], axis=1).astype(jnp.float32)    # [1, 2*l2]
    wd1f, bd1f = fold(wd1, bd1, gd1, bd1b, md1, vd1)
    wd2f = wd2.astype(jnp.bfloat16)
    bd2f = bd2.astype(jnp.float32)

    return (w1, b1f, w2, b2f, wh, bh, wd1f, bd1f, wd2f, bd2f)


@functools.partial(jax.jit, static_argnames=("input_dim", "latent_dims"))
def vae_forward(x, eps, kparams, *, input_dim, latent_dims):
    B = x.shape[0]
    l2 = latent_dims[-1]
    out_w = input_dim + 3 * l2
    out_w_pad = _round_up(out_w, 128)            # lane-dense (unmasked) stores

    tile_b, Bp = _tile_for_batch(B)
    x = x.astype(jnp.bfloat16)                   # halve x input DMA bytes
    if Bp != B:
        x = jnp.pad(x, ((0, Bp - B), (0, 0)))
        eps = jnp.pad(eps, ((0, Bp - B), (0, 0)))

    batch_map = lambda i: (i, 0)      # tiled over batch
    resident = lambda i: (0, 0)       # weights stay VMEM-resident across grid steps

    # TODO(synk): at realistic VAE sizes on v7x, mark weight specs with
    # pipeline_mode=pl.Buffered(1) to drop the dead second pipeline buffer.
    in_specs = [
        pl.BlockSpec((tile_b, input_dim), batch_map),   # x  (bf16)
        pl.BlockSpec((tile_b, l2), batch_map),          # eps (f32, epilogue only)
    ] + [pl.BlockSpec(p.shape, resident) for p in kparams]

    packed = pl.pallas_call(
        _vae_kernel,
        out_shape=jax.ShapeDtypeStruct((Bp, out_w_pad), jnp.bfloat16),
        grid=(Bp // tile_b,),
        in_specs=in_specs,
        out_specs=pl.BlockSpec((tile_b, out_w_pad), batch_map),
        compiler_params=pltpu.CompilerParams(
            dimension_semantics=("parallel",)),
    )(x, eps, *kparams)

    packed = packed[:B, :out_w].astype(jnp.float32)
    recon = packed[:, :input_dim]
    mu = packed[:, input_dim:input_dim + l2]
    logvar = packed[:, input_dim + l2:input_dim + 2 * l2]
    z = packed[:, input_dim + 2 * l2:input_dim + 3 * l2]
    return recon, mu, logvar, z


def vae_forward_ref(x, eps, params):
    """Pure-JAX f32 reference with the ORIGINAL (unfolded) eval-mode semantics."""
    (we1, be1, g1, b1, m1, v1,
     we2, be2, g2, b2, m2, v2,
     wmu, bmu, wlv, blv,
     wd1, bd1, gd1, bd1b, md1, vd1,
     wd2, bd2) = params

    def bn(h, g, b, m, v):
        return (h - m) * (g / jnp.sqrt(v + BN_EPS)) + b

    h = jnp.maximum(bn(x @ we1 + be1, g1, b1, m1, v1), 0.0)
    h = jnp.maximum(bn(h @ we2 + be2, g2, b2, m2, v2), 0.0)
    mu = h @ wmu + bmu
    logvar = h @ wlv + blv
    z = mu + eps * jnp.exp(0.5 * logvar)
    d = jnp.maximum(bn(z @ wd1 + bd1, gd1, bd1b, md1, vd1), 0.0)
    recon = d @ wd2 + bd2
    return recon, mu, logvar, z


if __name__ == "__main__":
    B = 8
    INPUT_DIM = 32
    LATENT_DIMS = (64, 16)

    key = jax.random.PRNGKey(0)
    k_x, k_eps, k_p = jax.random.split(key, 3)

    x = jax.random.normal(k_x, (B, INPUT_DIM), jnp.float32)
    eps = jax.random.normal(k_eps, (B, LATENT_DIMS[-1]), jnp.float32)
    params = make_params(k_p, INPUT_DIM, LATENT_DIMS)
    kparams = prepare_kernel_params(params)

    recon, mu, logvar, z = vae_forward(
        x, eps, kparams, input_dim=INPUT_DIM, latent_dims=LATENT_DIMS)
    jax.block_until_ready((recon, mu, logvar, z))

    # Loose tolerance: bf16 MXU operands (f32 accumulation) + bf16 output slab.
    r_ref, mu_ref, lv_ref, z_ref = vae_forward_ref(x, eps, params)
    np.testing.assert_allclose(np.asarray(recon), np.asarray(r_ref), atol=5e-2, rtol=5e-2)
    np.testing.assert_allclose(np.asarray(mu), np.asarray(mu_ref), atol=5e-2, rtol=5e-2)
    np.testing.assert_allclose(np.asarray(logvar), np.asarray(lv_ref), atol=5e-2, rtol=5e-2)
    np.testing.assert_allclose(np.asarray(z), np.asarray(z_ref), atol=5e-2, rtol=5e-2)

    print("KERNEL_OK")
</pallas_src>

<mosaic_0001>
module attributes {stable_mosaic.version = 11 : i64} {
  func.func @_vae_kernel(%arg0: i32, %arg1: memref<8x32xbf16, #tpu.memory_space<vmem>>, %arg2: memref<8x16xf32, #tpu.memory_space<vmem>>, %arg3: memref<32x64xbf16, #tpu.memory_space<vmem>>, %arg4: memref<1x64xf32, #tpu.memory_space<vmem>>, %arg5: memref<64x16xbf16, #tpu.memory_space<vmem>>, %arg6: memref<1x16xf32, #tpu.memory_space<vmem>>, %arg7: memref<16x32xbf16, #tpu.memory_space<vmem>>, %arg8: memref<1x32xf32, #tpu.memory_space<vmem>>, %arg9: memref<16x64xbf16, #tpu.memory_space<vmem>>, %arg10: memref<1x64xf32, #tpu.memory_space<vmem>>, %arg11: memref<64x32xbf16, #tpu.memory_space<vmem>>, %arg12: memref<1x32xf32, #tpu.memory_space<vmem>>, %arg13: memref<8x128xbf16, #tpu.memory_space<vmem>>) attributes {dimension_semantics = [#tpu.dimension_semantics<parallel>], iteration_bounds = array<i64: 1>, scalar_prefetch = 0 : i64, scratch_operands = 0 : i64, tpu.core_type = #tpu.core_type<tc>, window_params = [{transform_indices = @transform_0, window_bounds = array<i64: 8, 32>}, {transform_indices = @transform_1, window_bounds = array<i64: 8, 16>}, {pipeline_mode = #tpu.pipeline_mode<synchronous>, transform_indices = @transform_2, window_bounds = array<i64: 32, 64>}, {pipeline_mode = #tpu.pipeline_mode<synchronous>, transform_indices = @transform_3, window_bounds = array<i64: 1, 64>}, {pipeline_mode = #tpu.pipeline_mode<synchronous>, transform_indices = @transform_4, window_bounds = array<i64: 64, 16>}, {pipeline_mode = #tpu.pipeline_mode<synchronous>, transform_indices = @transform_5, window_bounds = array<i64: 1, 16>}, {pipeline_mode = #tpu.pipeline_mode<synchronous>, transform_indices = @transform_6, window_bounds = array<i64: 16, 32>}, {pipeline_mode = #tpu.pipeline_mode<synchronous>, transform_indices = @transform_7, window_bounds = array<i64: 1, 32>}, {pipeline_mode = #tpu.pipeline_mode<synchronous>, transform_indices = @transform_8, window_bounds = array<i64: 16, 64>}, {pipeline_mode = #tpu.pipeline_mode<synchronous>, transform_indices = @transform_9, window_bounds = array<i64: 1, 64>}, {pipeline_mode = #tpu.pipeline_mode<synchronous>, transform_indices = @transform_10, window_bounds = array<i64: 64, 32>}, {pipeline_mode = #tpu.pipeline_mode<synchronous>, transform_indices = @transform_11, window_bounds = array<i64: 1, 32>}, {transform_indices = @transform_12, window_bounds = array<i64: 8, 128>}]} {
    %c0 = arith.constant 0 : index
    %c0_0 = arith.constant 0 : index
    %0 = vector.load %arg1[%c0, %c0_0] : memref<8x32xbf16, #tpu.memory_space<vmem>>, vector<8x32xbf16>
    %c0_1 = arith.constant 0 : index
    %c0_2 = arith.constant 0 : index
    %1 = vector.load %arg3[%c0_1, %c0_2] : memref<32x64xbf16, #tpu.memory_space<vmem>>, vector<32x64xbf16>
    %cst = arith.constant dense<0.000000e+00> : vector<8x64xf32>
    %2 = tpu.matmul %0, %1, %cst {dimension_numbers = #tpu.dot_dimension_numbers<[1], [0], [0], [1], [0, 0, 1, 1], [], []>} : vector<8x32xbf16>, vector<32x64xbf16>, vector<8x64xf32> -> vector<8x64xf32>
    %c0_3 = arith.constant 0 : index
    %c0_4 = arith.constant 0 : index
    %3 = vector.load %arg4[%c0_3, %c0_4] : memref<1x64xf32, #tpu.memory_space<vmem>>, vector<1x64xf32>
    %4 = vector.broadcast %3 : vector<1x64xf32> to vector<8x64xf32>
    %5 = arith.addf %2, %4 : vector<8x64xf32>
    %cst_5 = arith.constant 0.000000e+00 : f32
    %6 = vector.broadcast %cst_5 : f32 to vector<8x64xf32>
    %7 = arith.maximumf %5, %6 : vector<8x64xf32>
    %8 = arith.truncf %7 : vector<8x64xf32> to vector<8x64xbf16>
    %c0_6 = arith.constant 0 : index
    %c0_7 = arith.constant 0 : index
    %9 = vector.load %arg5[%c0_6, %c0_7] : memref<64x16xbf16, #tpu.memory_space<vmem>>, vector<64x16xbf16>
    %cst_8 = arith.constant dense<0.000000e+00> : vector<8x16xf32>
    %10 = tpu.matmul %8, %9, %cst_8 {dimension_numbers = #tpu.dot_dimension_numbers<[1], [0], [0], [1], [0, 0, 1, 1], [], []>} : vector<8x64xbf16>, vector<64x16xbf16>, vector<8x16xf32> -> vector<8x16xf32>
    %c0_9 = arith.constant 0 : index
    %c0_10 = arith.constant 0 : index
    %11 = vector.load %arg6[%c0_9, %c0_10] : memref<1x16xf32, #tpu.memory_space<vmem>>, vector<1x16xf32>
    %12 = vector.broadcast %11 : vector<1x16xf32> to vector<8x16xf32>
    %13 = arith.addf %10, %12 : vector<8x16xf32>
    %cst_11 = arith.constant 0.000000e+00 : f32
    %14 = vector.broadcast %cst_11 : f32 to vector<8x16xf32>
    %15 = arith.maximumf %13, %14 : vector<8x16xf32>
    %16 = arith.truncf %15 : vector<8x16xf32> to vector<8x16xbf16>
    %c0_12 = arith.constant 0 : index
    %c0_13 = arith.constant 0 : index
    %17 = vector.load %arg7[%c0_12, %c0_13] : memref<16x32xbf16, #tpu.memory_space<vmem>>, vector<16x32xbf16>
    %cst_14 = arith.constant dense<0.000000e+00> : vector<8x32xf32>
    %18 = tpu.matmul %16, %17, %cst_14 {dimension_numbers = #tpu.dot_dimension_numbers<[1], [0], [0], [1], [0, 0, 1, 1], [], []>} : vector<8x16xbf16>, vector<16x32xbf16>, vector<8x32xf32> -> vector<8x32xf32>
    %c0_15 = arith.constant 0 : index
    %c0_16 = arith.constant 0 : index
    %19 = vector.load %arg8[%c0_15, %c0_16] : memref<1x32xf32, #tpu.memory_space<vmem>>, vector<1x32xf32>
    %20 = vector.broadcast %19 : vector<1x32xf32> to vector<8x32xf32>
    %21 = arith.addf %18, %20 : vector<8x32xf32>
    %22 = vector.extract_strided_slice %21 {offsets = [0, 0], sizes = [8, 16], strides = [1, 1]} : vector<8x32xf32> to vector<8x16xf32>
    %23 = vector.extract_strided_slice %21 {offsets = [0, 16], sizes = [8, 16], strides = [1, 1]} : vector<8x32xf32> to vector<8x16xf32>
    %c0_17 = arith.constant 0 : index
    %c0_18 = arith.constant 0 : index
    %24 = vector.load %arg2[%c0_17, %c0_18] : memref<8x16xf32, #tpu.memory_space<vmem>>, vector<8x16xf32>
    %cst_19 = arith.constant 5.000000e-01 : f32
    %25 = vector.broadcast %cst_19 : f32 to vector<8x16xf32>
    %26 = arith.mulf %25, %23 : vector<8x16xf32>
    %27 = math.exp %26 : vector<8x16xf32>
    %28 = arith.mulf %24, %27 : vector<8x16xf32>
    %29 = arith.addf %22, %28 : vector<8x16xf32>
    %30 = arith.truncf %29 : vector<8x16xf32> to vector<8x16xbf16>
    %c0_20 = arith.constant 0 : index
    %c0_21 = arith.constant 0 : index
    %31 = vector.load %arg9[%c0_20, %c0_21] : memref<16x64xbf16, #tpu.memory_space<vmem>>, vector<16x64xbf16>
    %cst_22 = arith.constant dense<0.000000e+00> : vector<8x64xf32>
    %32 = tpu.matmul %30, %31, %cst_22 {dimension_numbers = #tpu.dot_dimension_numbers<[1], [0], [0], [1], [0, 0, 1, 1], [], []>} : vector<8x16xbf16>, vector<16x64xbf16>, vector<8x64xf32> -> vector<8x64xf32>
    %c0_23 = arith.constant 0 : index
    %c0_24 = arith.constant 0 : index
    %33 = vector.load %arg10[%c0_23, %c0_24] : memref<1x64xf32, #tpu.memory_space<vmem>>, vector<1x64xf32>
    %34 = vector.broadcast %33 : vector<1x64xf32> to vector<8x64xf32>
    %35 = arith.addf %32, %34 : vector<8x64xf32>
    %cst_25 = arith.constant 0.000000e+00 : f32
    %36 = vector.broadcast %cst_25 : f32 to vector<8x64xf32>
    %37 = arith.maximumf %35, %36 : vector<8x64xf32>
    %38 = arith.truncf %37 : vector<8x64xf32> to vector<8x64xbf16>
    %c0_26 = arith.constant 0 : index
    %c0_27 = arith.constant 0 : index
    %39 = vector.load %arg11[%c0_26, %c0_27] : memref<64x32xbf16, #tpu.memory_space<vmem>>, vector<64x32xbf16>
    %cst_28 = arith.constant dense<0.000000e+00> : vector<8x32xf32>
    %40 = tpu.matmul %38, %39, %cst_28 {dimension_numbers = #tpu.dot_dimension_numbers<[1], [0], [0], [1], [0, 0, 1, 1], [], []>} : vector<8x64xbf16>, vector<64x32xbf16>, vector<8x32xf32> -> vector<8x32xf32>
    %c0_29 = arith.constant 0 : index
    %c0_30 = arith.constant 0 : index
    %41 = vector.load %arg12[%c0_29, %c0_30] : memref<1x32xf32, #tpu.memory_space<vmem>>, vector<1x32xf32>
    %42 = vector.broadcast %41 : vector<1x32xf32> to vector<8x32xf32>
    %43 = arith.addf %40, %42 : vector<8x32xf32>
    %cst_31 = arith.constant 0.000000e+00 : f32
    %44 = vector.broadcast %cst_31 : f32 to vector<8x48xf32>
    %45 = tpu.concatenate %43, %22, %23, %29, %44 in 1 : vector<8x32xf32>, vector<8x16xf32>, vector<8x16xf32>, vector<8x16xf32>, vector<8x48xf32> -> vector<8x128xf32>
    %46 = arith.truncf %45 : vector<8x128xf32> to vector<8x128xbf16>
    %c0_32 = arith.constant 0 : index
    %c0_33 = arith.constant 0 : index
    %47 = vector.load %arg13[%c0_32, %c0_33] : memref<8x128xbf16, #tpu.memory_space<vmem>>, vector<8x128xbf16>
    tpu.vector_store %arg13[%c0_32, %c0_33], %46 {strides = array<i32>} : memref<8x128xbf16, #tpu.memory_space<vmem>>, vector<8x128xbf16>,
    return
  }
  func.func @transform_0(%arg0: i32) -> (i32, i32) {
    %c0_i32 = arith.constant 0 : i32
    %c0_i32_0 = arith.constant 0 : i32
    return %arg0, %c0_i32 : i32, i32
  }
  func.func @transform_1(%arg0: i32) -> (i32, i32) {
    %c0_i32 = arith.constant 0 : i32
    %c0_i32_0 = arith.constant 0 : i32
    return %arg0, %c0_i32 : i32, i32
  }
  func.func @transform_2(%arg0: i32) -> (i32, i32) {
    %c0_i32 = arith.constant 0 : i32
    %c0_i32_0 = arith.constant 0 : i32
    %c0_i32_1 = arith.constant 0 : i32
    return %c0_i32, %c0_i32_0 : i32, i32
  }
  func.func @transform_3(%arg0: i32) -> (i32, i32) {
    %c0_i32 = arith.constant 0 : i32
    %c0_i32_0 = arith.constant 0 : i32
    %c0_i32_1 = arith.constant 0 : i32
    return %c0_i32, %c0_i32_0 : i32, i32
  }
  func.func @transform_4(%arg0: i32) -> (i32, i32) {
    %c0_i32 = arith.constant 0 : i32
    %c0_i32_0 = arith.constant 0 : i32
    %c0_i32_1 = arith.constant 0 : i32
    return %c0_i32, %c0_i32_0 : i32, i32
  }
  func.func @transform_5(%arg0: i32) -> (i32, i32) {
    %c0_i32 = arith.constant 0 : i32
    %c0_i32_0 = arith.constant 0 : i32
    %c0_i32_1 = arith.constant 0 : i32
    return %c0_i32, %c0_i32_0 : i32, i32
  }
  func.func @transform_6(%arg0: i32) -> (i32, i32) {
    %c0_i32 = arith.constant 0 : i32
    %c0_i32_0 = arith.constant 0 : i32
    %c0_i32_1 = arith.constant 0 : i32
    return %c0_i32, %c0_i32_0 : i32, i32
  }
  func.func @transform_7(%arg0: i32) -> (i32, i32) {
    %c0_i32 = arith.constant 0 : i32
    %c0_i32_0 = arith.constant 0 : i32
    %c0_i32_1 = arith.constant 0 : i32
    return %c0_i32, %c0_i32_0 : i32, i32
  }
  func.func @transform_8(%arg0: i32) -> (i32, i32) {
    %c0_i32 = arith.constant 0 : i32
    %c0_i32_0 = arith.constant 0 : i32
    %c0_i32_1 = arith.constant 0 : i32
    return %c0_i32, %c0_i32_0 : i32, i32
  }
  func.func @transform_9(%arg0: i32) -> (i32, i32) {
    %c0_i32 = arith.constant 0 : i32
    %c0_i32_0 = arith.constant 0 : i32
    %c0_i32_1 = arith.constant 0 : i32
    return %c0_i32, %c0_i32_0 : i32, i32
  }
  func.func @transform_10(%arg0: i32) -> (i32, i32) {
    %c0_i32 = arith.constant 0 : i32
    %c0_i32_0 = arith.constant 0 : i32
    %c0_i32_1 = arith.constant 0 : i32
    return %c0_i32, %c0_i32_0 : i32, i32
  }
  func.func @transform_11(%arg0: i32) -> (i32, i32) {
    %c0_i32 = arith.constant 0 : i32
    %c0_i32_0 = arith.constant 0 : i32
    %c0_i32_1 = arith.constant 0 : i32
    return %c0_i32, %c0_i32_0 : i32, i32
  }
  func.func @transform_12(%arg0: i32) -> (i32, i32) {
    %c0_i32 = arith.constant 0 : i32
    %c0_i32_0 = arith.constant 0 : i32
    return %arg0, %c0_i32 : i32, i32
  }
}

</mosaic_0001>

<llo_original>
// kernel: vae_forward.1
$region0: #{vae_forward.1}
  #allocation0 [shape = 'u32[]', space=smem, size = 0x4, offset = 0x4, fixed_abs, tag = 'smem constant byte address 0x4 - core index']
  #allocation1 [shape = 'u32[144,128]{1,0:T(1,128)}', space=vmem, size = 0x12000, scoped, tag = 'internal scratch']
  %s0 = inlined_call_operand.vmem [shape: bf16[8,32], index: 0, kind: input, shape index: {}]
  %s1 = inlined_call_operand.vmem [shape: f32[8,16], index: 1, kind: input, shape index: {}]
  %s2 = inlined_call_operand.vmem [shape: bf16[32,64], index: 2, kind: input, shape index: {}]
  %s3 = inlined_call_operand.vmem [shape: f32[1,64], index: 3, kind: input, shape index: {}]
  %s4 = inlined_call_operand.vmem [shape: bf16[64,16], index: 4, kind: input, shape index: {}]
  %s5 = inlined_call_operand.vmem [shape: f32[1,16], index: 5, kind: input, shape index: {}]
  %s6 = inlined_call_operand.vmem [shape: bf16[16,32], index: 6, kind: input, shape index: {}]
  %s7 = inlined_call_operand.vmem [shape: f32[1,32], index: 7, kind: input, shape index: {}]
  %s8 = inlined_call_operand.vmem [shape: bf16[16,64], index: 8, kind: input, shape index: {}]
  %s9 = inlined_call_operand.vmem [shape: f32[1,64], index: 9, kind: input, shape index: {}]
  %s10 = inlined_call_operand.vmem [shape: bf16[64,32], index: 10, kind: input, shape index: {}]
  %s11 = inlined_call_operand.vmem [shape: f32[1,32], index: 11, kind: input, shape index: {}]
  %s12 = inlined_call_operand.vmem [shape: bf16[8,128], index: 12, kind: output, shape index: {}]
  %s13 = sld [smem:[#allocation0]]
  $region58: #{vae_forward.1} parent=0
    _
  %s15 = ssub.s32 1, %s13
  %s16 = scalar_select 0, %s15, %s13
  // Predicated region
  $region2: #{vae_forward.1} parent=0 // pred_check
    _
  $region3: #{vae_forward.1} parent=0 // pred_check_branch
    %18 = sbr.rel (0) target = $region5
  $region4: #{vae_forward.1} parent=0 // pred_region
    _
  $region5: #{vae_forward.1} parent=0 // pred_fallthru
    _
  // Predicated region
  $region6: #{vae_forward.1} parent=0 // pred_check
    _
  $region7: #{vae_forward.1} parent=0 // pred_check_branch
    %20 = sbr.rel (0) target = $region9
  $region8: #{vae_forward.1} parent=0 // pred_region
    _
  $region9: #{vae_forward.1} parent=0 // pred_fallthru
    _
  // Predicated region
  $region10: #{vae_forward.1} parent=0 // pred_check
    _
  $region11: #{vae_forward.1} parent=0 // pred_check_branch
    %22 = sbr.rel (0) target = $region13
  $region12: #{vae_forward.1} parent=0 // pred_region
    _
  $region13: #{vae_forward.1} parent=0 // pred_fallthru
    _
  // Predicated region
  $region14: #{vae_forward.1} parent=0 // pred_check
    _
  $region15: #{vae_forward.1} parent=0 // pred_check_branch
    %24 = sbr.rel (0) target = $region17
  $region16: #{vae_forward.1} parent=0 // pred_region
    _
  $region17: #{vae_forward.1} parent=0 // pred_fallthru
    _
  // Predicated region
  $region18: #{vae_forward.1} parent=0 // pred_check
    _
  $region19: #{vae_forward.1} parent=0 // pred_check_branch
    %26 = sbr.rel (0) target = $region21
  $region20: #{vae_forward.1} parent=0 // pred_region
    _
  $region21: #{vae_forward.1} parent=0 // pred_fallthru
    _
  // Predicated region
  $region22: #{vae_forward.1} parent=0 // pred_check
    _
  $region23: #{vae_forward.1} parent=0 // pred_check_branch
    %28 = sbr.rel (0) target = $region25
  $region24: #{vae_forward.1} parent=0 // pred_region
    _
  $region25: #{vae_forward.1} parent=0 // pred_fallthru
    _
  // Predicated region
  $region26: #{vae_forward.1} parent=0 // pred_check
    _
  $region27: #{vae_forward.1} parent=0 // pred_check_branch
    %30 = sbr.rel (0) target = $region29
  $region28: #{vae_forward.1} parent=0 // pred_region
    _
  $region29: #{vae_forward.1} parent=0 // pred_fallthru
    _
  // Predicated region
  $region30: #{vae_forward.1} parent=0 // pred_check
    _
  $region31: #{vae_forward.1} parent=0 // pred_check_branch
    %32 = sbr.rel (0) target = $region33
  $region32: #{vae_forward.1} parent=0 // pred_region
    _
  $region33: #{vae_forward.1} parent=0 // pred_fallthru
    _
  // Predicated region
  $region34: #{vae_forward.1} parent=0 // pred_check
    _
  $region35: #{vae_forward.1} parent=0 // pred_check_branch
    %34 = sbr.rel (0) target = $region37
  $region36: #{vae_forward.1} parent=0 // pred_region
    _
  $region37: #{vae_forward.1} parent=0 // pred_fallthru
    _
  // Predicated region
  $region38: #{vae_forward.1} parent=0 // pred_check
    _
  $region39: #{vae_forward.1} parent=0 // pred_check_branch
    %36 = sbr.rel (0) target = $region41
  $region40: #{vae_forward.1} parent=0 // pred_region
    _
  $region41: #{vae_forward.1} parent=0 // pred_fallthru
    _
  // Predicated region
  $region42: #{vae_forward.1} parent=0 // pred_check
    _
  $region43: #{vae_forward.1} parent=0 // pred_check_branch
    %38 = sbr.rel (0) target = $region45
  $region44: #{vae_forward.1} parent=0 // pred_region
    _
  $region45: #{vae_forward.1} parent=0 // pred_fallthru
    _
  // Predicated region
  $region46: #{vae_forward.1} parent=0 // pred_check
    _
  $region47: #{vae_forward.1} parent=0 // pred_check_branch
    %40 = sbr.rel (0) target = $region49
  $region48: #{vae_forward.1} parent=0 // pred_region
    _
  $region49: #{vae_forward.1} parent=0 // pred_fallthru
    _
  %v42 = vld [vmem:[%s0] sm:$0xf]
  %v43 = vld [vmem:[%s2] sm:$0xf]
  %v44 = vld [vmem:[%s2 + $0x4] sm:$0xf]
  %v45 = vld [vmem:[%s2 + $0x8] sm:$0xf]
  %v46 = vld [vmem:[%s2 + $0xc] sm:$0xf]
  %v47 = vld [vmem:[%s3] sm:$0x1]
  %v49 = vlaneseq
  %v50 = vshrl.u32 %v49, 7
  %v51 = vsub.s32 0, %v50
  %v52 = vrot.slane %v47, %v51
  %v58 = vunpack.c.l.b16 %v43
  %v59 = vunpack.c.l.b16 %v44
  %v60 = vunpack.c.l.b16 %v45
  %v61 = vunpack.c.l.b16 %v46
  %v62 = vpack.c.b16 %v59, %v58
  %v63 = vpack.c.b16 %v61, %v60
  %vm66 = vcmask 261120
  %v68 = vsel %vm66, %v42, 0
  %70 = vmatprep.subr.bf16.mxu0 0
  %71 = vmatpush1.bf16.msra.mxu0 %v62
  %72 = vmatprep.subr.bf16.mxu0 0
  %73 = vmatpush1.bf16.msra.mxu0 %v63
  %74 = vmatprep.subr.bf16.mxu0 0
  %75 = vmatpush1.bf16.msra.mxu0 0
  %76 = vmatprep.subr.bf16.mxu0 0
  %77 = vmatpush1.bf16.msra.mxu0 0
  %78 = vmatprep.subr.bf16.mxu0 0
  %79 = vmatpush1.bf16.msra.mxu0 0
  %80 = vmatprep.subr.bf16.mxu0 0
  %81 = vmatpush1.bf16.msra.mxu0 0
  %82 = vmatprep.subr.bf16.mxu0 0
  %83 = vmatpush1.bf16.msra.mxu0 0
  %84 = vmatprep.subr.bf16.mxu0 0
  %85 = vmatpush1.bf16.msra.mxu0 0
  %86 = vmatprep.subr.bf16.mxu0 0
  %87 = vmatpush1.bf16.msra.mxu0 0
  %88 = vmatprep.subr.bf16.mxu0 0
  %89 = vmatpush1.bf16.msra.mxu0 0
  %90 = vmatprep.subr.bf16.mxu0 0
  %91 = vmatpush1.bf16.msra.mxu0 0
  %92 = vmatprep.subr.bf16.mxu0 0
  %93 = vmatpush1.bf16.msra.mxu0 0
  %94 = vmatprep.subr.bf16.mxu0 0
  %95 = vmatpush1.bf16.msra.mxu0 0
  %96 = vmatprep.subr.bf16.mxu0 0
  %97 = vmatpush1.bf16.msra.mxu0 0
  %98 = vmatprep.subr.bf16.mxu0 0
  %99 = vmatpush1.bf16.msra.mxu0 0
  %100 = vmatprep.subr.bf16.mxu0 0
  %101 = vmatpush1.bf16.msra.mxu0 0
  %102 = vmatprep.mubr.bf16.mxu0 0
  %103 = vmatmul.mubr.bf16.gmra.mrb[0].mxu0 %v68
  %v104 = vpop.f32.mrb[0].mxu0
  %v105 = vadd.f32 %v52, %v104
  %v106 = vpop.f32.mrb[0].mxu0
  %v107 = vpop.f32.mrb[0].mxu0
  %v108 = vpop.f32.mrb[0].mxu0
  %109 = vdwg.mxu0
  %v110 = vmax.f32 %v105, 0.0
  %v111 = vpack.c.bf16 %v110, %v110
  %v112 = vld [vmem:[%s4] sm:$0xf]
  %v113 = vld [vmem:[%s4 + $0x4] sm:$0xf]
  %v114 = vld [vmem:[%s4 + $0x8] sm:$0xf]
  %v115 = vld [vmem:[%s4 + $0xc] sm:$0xf]
  %v116 = vld [vmem:[%s4 + $0x10] sm:$0xf]
  %v117 = vld [vmem:[%s4 + $0x14] sm:$0xf]
  %v118 = vld [vmem:[%s4 + $0x18] sm:$0xf]
  %v119 = vld [vmem:[%s4 + $0x1c] sm:$0xf]
  %v120 = vld [vmem:[%s5] sm:$0x1]
  %v122 = vlaneseq
  %v123 = vshrl.u32 %v122, 7
  %v124 = vsub.s32 0, %v123
  %v125 = vrot.slane %v120, %v124
  %v135 = vunpack.c.l.b16 %v112
  %v136 = vunpack.c.l.b16 %v113
  %v137 = vunpack.c.l.b16 %v114
  %v138 = vunpack.c.l.b16 %v115
  %v139 = vunpack.c.l.b16 %v116
  %v140 = vunpack.c.l.b16 %v117
  %v141 = vunpack.c.l.b16 %v118
  %v142 = vunpack.c.l.b16 %v119
  %v143 = vpack.c.b16 %v136, %v135
  %v144 = vpack.c.b16 %v138, %v137
  %v145 = vpack.c.b16 %v140, %v139
  %v146 = vpack.c.b16 %v142, %v141
  %vm151 = vcmask 523264
  %v153 = vsel %vm151, %v111, 0
  %155 = vmatprep.subr.bf16.mxu0 0
  %156 = vmatpush1.bf16.msra.mxu0 %v143
  %157 = vmatprep.subr.bf16.mxu0 0
  %158 = vmatpush1.bf16.msra.mxu0 %v144
  %159 = vmatprep.subr.bf16.mxu0 0
  %160 = vmatpush1.bf16.msra.mxu0 %v145
  %161 = vmatprep.subr.bf16.mxu0 0
  %162 = vmatpush1.bf16.msra.mxu0 %v146
  %163 = vmatprep.subr.bf16.mxu0 0
  %164 = vmatpush1.bf16.msra.mxu0 0
  %165 = vmatprep.subr.bf16.mxu0 0
  %166 = vmatpush1.bf16.msra.mxu0 0
  %167 = vmatprep.subr.bf16.mxu0 0
  %168 = vmatpush1.bf16.msra.mxu0 0
  %169 = vmatprep.subr.bf16.mxu0 0
  %170 = vmatpush1.bf16.msra.mxu0 0
  %171 = vmatprep.subr.bf16.mxu0 0
  %172 = vmatpush1.bf16.msra.mxu0 0
  %173 = vmatprep.subr.bf16.mxu0 0
  %174 = vmatpush1.bf16.msra.mxu0 0
  %175 = vmatprep.subr.bf16.mxu0 0
  %176 = vmatpush1.bf16.msra.mxu0 0
  %177 = vmatprep.subr.bf16.mxu0 0
  %178 = vmatpush1.bf16.msra.mxu0 0
  %179 = vmatprep.subr.bf16.mxu0 0
  %180 = vmatpush1.bf16.msra.mxu0 0
  %181 = vmatprep.subr.bf16.mxu0 0
  %182 = vmatpush1.bf16.msra.mxu0 0
  %183 = vmatprep.subr.bf16.mxu0 0
  %184 = vmatpush1.bf16.msra.mxu0 0
  %185 = vmatprep.subr.bf16.mxu0 0
  %186 = vmatpush1.bf16.msra.mxu0 0
  %187 = vmatprep.mubr.bf16.mxu0 0
  %188 = vmatmul.mubr.bf16.gmra.mrb[0].mxu0 %v153
  %v189 = vpop.f32.mrb[0].mxu0
  %v190 = vadd.f32 %v125, %v189
  %v191 = vpop.f32.mrb[0].mxu0
  %v192 = vpop.f32.mrb[0].mxu0
  %v193 = vpop.f32.mrb[0].mxu0
  %194 = vdwg.mxu0
  %v195 = vmax.f32 %v190, 0.0
  %v196 = vpack.c.bf16 %v195, %v195
  %v197 = vld [vmem:[%s6] sm:$0xf]
  %v198 = vld [vmem:[%s6 + $0x4] sm:$0xf]
  %v199 = vld [vmem:[%s7] sm:$0x1]
  %v201 = vlaneseq
  %v202 = vshrl.u32 %v201, 7
  %v203 = vsub.s32 0, %v202
  %v204 = vrot.slane %v199, %v203
  %v208 = vunpack.c.l.b16 %v197
  %v209 = vunpack.c.l.b16 %v198
  %v210 = vpack.c.b16 %v209, %v208
  %vm212 = vcmask 130048
  %v214 = vsel %vm212, %v196, 0
  %216 = vmatprep.subr.bf16.mxu0 0
  %217 = vmatpush1.bf16.msra.mxu0 %v210
  %218 = vmatprep.subr.bf16.mxu0 0
  %219 = vmatpush1.bf16.msra.mxu0 0
  %220 = vmatprep.subr.bf16.mxu0 0
  %221 = vmatpush1.bf16.msra.mxu0 0
  %222 = vmatprep.subr.bf16.mxu0 0
  %223 = vmatpush1.bf16.msra.mxu0 0
  %224 = vmatprep.subr.bf16.mxu0 0
  %225 = vmatpush1.bf16.msra.mxu0 0
  %226 = vmatprep.subr.bf16.mxu0 0
  %227 = vmatpush1.bf16.msra.mxu0 0
  %228 = vmatprep.subr.bf16.mxu0 0
  %229 = vmatpush1.bf16.msra.mxu0 0
  %230 = vmatprep.subr.bf16.mxu0 0
  %231 = vmatpush1.bf16.msra.mxu0 0
  %232 = vmatprep.subr.bf16.mxu0 0
  %233 = vmatpush1.bf16.msra.mxu0 0
  %234 = vmatprep.subr.bf16.mxu0 0
  %235 = vmatpush1.bf16.msra.mxu0 0
  %236 = vmatprep.subr.bf16.mxu0 0
  %237 = vmatpush1.bf16.msra.mxu0 0
  %238 = vmatprep.subr.bf16.mxu0 0
  %239 = vmatpush1.bf16.msra.mxu0 0
  %240 = vmatprep.subr.bf16.mxu0 0
  %241 = vmatpush1.bf16.msra.mxu0 0
  %242 = vmatprep.subr.bf16.mxu0 0
  %243 = vmatpush1.bf16.msra.mxu0 0
  %244 = vmatprep.subr.bf16.mxu0 0
  %245 = vmatpush1.bf16.msra.mxu0 0
  %246 = vmatprep.subr.bf16.mxu0 0
  %247 = vmatpush1.bf16.msra.mxu0 0
  %248 = vmatprep.mubr.bf16.mxu0 0
  %249 = vmatmul.mubr.bf16.gmra.mrb[0].mxu0 %v214
  %v250 = vpop.f32.mrb[0].mxu0
  %v251 = vadd.f32 %v204, %v250
  %v252 = vpop.f32.mrb[0].mxu0
  %v253 = vpop.f32.mrb[0].mxu0
  %v254 = vpop.f32.mrb[0].mxu0
  %255 = vdwg.mxu0
  %v256 = vld [vmem:[%s1] sm:$0xff]
  %v257 = vmul.f32 %v251, 0.5
  %v258 = vmul.f32 %v257, 1.442695
  %v259 = vpow.pop %v258
  %261 = vrot.lane.b32.xlu0 %v259, 112
  %v262 = vpop.permute.xlu0 %261
  %v264 = vmul.f32 %v256, %v262
  %v265 = vadd.f32 %v251, %v264
  %v266 = vpack.c.bf16 %v265, %v265
  %v267 = vld [vmem:[%s8] sm:$0xf]
  %v268 = vld [vmem:[%s8 + $0x4] sm:$0xf]
  %v269 = vld [vmem:[%s9] sm:$0x1]
  %v271 = vlaneseq
  %v272 = vshrl.u32 %v271, 7
  %v273 = vsub.s32 0, %v272
  %v274 = vrot.slane %v269, %v273
  %v278 = vunpack.c.l.b16 %v267
  %v279 = vunpack.c.l.b16 %v268
  %v280 = vpack.c.b16 %v279, %v278
  %v283 = vsel %vm212, %v266, 0
  %285 = vmatprep.subr.bf16.mxu0 0
  %286 = vmatpush1.bf16.msra.mxu0 %v280
  %287 = vmatprep.subr.bf16.mxu0 0
  %288 = vmatpush1.bf16.msra.mxu0 0
  %289 = vmatprep.subr.bf16.mxu0 0
  %290 = vmatpush1.bf16.msra.mxu0 0
  %291 = vmatprep.subr.bf16.mxu0 0
  %292 = vmatpush1.bf16.msra.mxu0 0
  %293 = vmatprep.subr.bf16.mxu0 0
  %294 = vmatpush1.bf16.msra.mxu0 0
  %295 = vmatprep.subr.bf16.mxu0 0
  %296 = vmatpush1.bf16.msra.mxu0 0
  %297 = vmatprep.subr.bf16.mxu0 0
  %298 = vmatpush1.bf16.msra.mxu0 0
  %299 = vmatprep.subr.bf16.mxu0 0
  %300 = vmatpush1.bf16.msra.mxu0 0
  %301 = vmatprep.subr.bf16.mxu0 0
  %302 = vmatpush1.bf16.msra.mxu0 0
  %303 = vmatprep.subr.bf16.mxu0 0
  %304 = vmatpush1.bf16.msra.mxu0 0
  %305 = vmatprep.subr.bf16.mxu0 0
  %306 = vmatpush1.bf16.msra.mxu0 0
  %307 = vmatprep.subr.bf16.mxu0 0
  %308 = vmatpush1.bf16.msra.mxu0 0
  %309 = vmatprep.subr.bf16.mxu0 0
  %310 = vmatpush1.bf16.msra.mxu0 0
  %311 = vmatprep.subr.bf16.mxu0 0
  %312 = vmatpush1.bf16.msra.mxu0 0
  %313 = vmatprep.subr.bf16.mxu0 0
  %314 = vmatpush1.bf16.msra.mxu0 0
  %315 = vmatprep.subr.bf16.mxu0 0
  %316 = vmatpush1.bf16.msra.mxu0 0
  %317 = vmatprep.mubr.bf16.mxu0 0
  %318 = vmatmul.mubr.bf16.gmra.mrb[0].mxu0 %v283
  %v319 = vpop.f32.mrb[0].mxu0
  %v320 = vadd.f32 %v274, %v319
  %v321 = vpop.f32.mrb[0].mxu0
  %v322 = vpop.f32.mrb[0].mxu0
  %v323 = vpop.f32.mrb[0].mxu0
  %324 = vdwg.mxu0
  %v325 = vmax.f32 %v320, 0.0
  %v326 = vpack.c.bf16 %v325, %v325
  %v327 = vld [vmem:[%s10] sm:$0xf]
  %v328 = vld [vmem:[%s10 + $0x4] sm:$0xf]
  %v329 = vld [vmem:[%s10 + $0x8] sm:$0xf]
  %v330 = vld [vmem:[%s10 + $0xc] sm:$0xf]
  %v331 = vld [vmem:[%s10 + $0x10] sm:$0xf]
  %v332 = vld [vmem:[%s10 + $0x14] sm:$0xf]
  %v333 = vld [vmem:[%s10 + $0x18] sm:$0xf]
  %v334 = vld [vmem:[%s10 + $0x1c] sm:$0xf]
  %v335 = vld [vmem:[%s11] sm:$0x1]
  %v337 = vlaneseq
  %v338 = vshrl.u32 %v337, 7
  %v339 = vsub.s32 0, %v338
  %v340 = vrot.slane %v335, %v339
  %v350 = vunpack.c.l.b16 %v327
  %v351 = vunpack.c.l.b16 %v328
  %v352 = vunpack.c.l.b16 %v329
  %v353 = vunpack.c.l.b16 %v330
  %v354 = vunpack.c.l.b16 %v331
  %v355 = vunpack.c.l.b16 %v332
  %v356 = vunpack.c.l.b16 %v333
  %v357 = vunpack.c.l.b16 %v334
  %v358 = vpack.c.b16 %v351, %v350
  %v359 = vpack.c.b16 %v353, %v352
  %v360 = vpack.c.b16 %v355, %v354
  %v361 = vpack.c.b16 %v357, %v356
  %v367 = vsel %vm151, %v326, 0
  %369 = vmatprep.subr.bf16.mxu0 0
  %370 = vmatpush1.bf16.msra.mxu0 %v358
  %371 = vmatprep.subr.bf16.mxu0 0
  %372 = vmatpush1.bf16.msra.mxu0 %v359
  %373 = vmatprep.subr.bf16.mxu0 0
  %374 = vmatpush1.bf16.msra.mxu0 %v360
  %375 = vmatprep.subr.bf16.mxu0 0
  %376 = vmatpush1.bf16.msra.mxu0 %v361
  %377 = vmatprep.subr.bf16.mxu0 0
  %378 = vmatpush1.bf16.msra.mxu0 0
  %379 = vmatprep.subr.bf16.mxu0 0
  %380 = vmatpush1.bf16.msra.mxu0 0
  %381 = vmatprep.subr.bf16.mxu0 0
  %382 = vmatpush1.bf16.msra.mxu0 0
  %383 = vmatprep.subr.bf16.mxu0 0
  %384 = vmatpush1.bf16.msra.mxu0 0
  %385 = vmatprep.subr.bf16.mxu0 0
  %386 = vmatpush1.bf16.msra.mxu0 0
  %387 = vmatprep.subr.bf16.mxu0 0
  %388 = vmatpush1.bf16.msra.mxu0 0
  %389 = vmatprep.subr.bf16.mxu0 0
  %390 = vmatpush1.bf16.msra.mxu0 0
  %391 = vmatprep.subr.bf16.mxu0 0
  %392 = vmatpush1.bf16.msra.mxu0 0
  %393 = vmatprep.subr.bf16.mxu0 0
  %394 = vmatpush1.bf16.msra.mxu0 0
  %395 = vmatprep.subr.bf16.mxu0 0
  %396 = vmatpush1.bf16.msra.mxu0 0
  %397 = vmatprep.subr.bf16.mxu0 0
  %398 = vmatpush1.bf16.msra.mxu0 0
  %399 = vmatprep.subr.bf16.mxu0 0
  %400 = vmatpush1.bf16.msra.mxu0 0
  %401 = vmatprep.mubr.bf16.mxu0 0
  %402 = vmatmul.mubr.bf16.gmra.mrb[0].mxu0 %v367
  %v403 = vpop.f32.mrb[0].mxu0
  %v404 = vadd.f32 %v340, %v403
  %v405 = vpop.f32.mrb[0].mxu0
  %v406 = vpop.f32.mrb[0].mxu0
  %v407 = vpop.f32.mrb[0].mxu0
  %408 = vdwg.mxu0
  %410 = vrot.lane.b32.xlu0 %v251, 32
  %v411 = vpop.permute.xlu0 %410
  %414 = vrot.lane.b32.xlu0 %v265, 64
  %v415 = vpop.permute.xlu0 %414
  %v417 = vsel %vm66, %v404, %v411
  %vm418 = vcmask 392192
  %v419 = vsel %vm418, %v417, %v411
  %v420 = vsel %vm151, %v419, %v415
  %vm421 = vcmask 654336
  %v422 = vsel %vm421, %v420, 0.0
  %v423 = vpack.c.bf16 %v422, %v422
  %424 = vst [vmem:[%s12] sm:$0xf] %v423
  // Predicated region
  $region50: #{vae_forward.1} parent=0 // pred_check
    _
  $region51: #{vae_forward.1} parent=0 // pred_check_branch
    %426 = sbr.rel (0) target = $region53
  $region52: #{vae_forward.1} parent=0 // pred_region
    _
  $region53: #{vae_forward.1} parent=0 // pred_fallthru
    _
  // Predicated region
  $region54: #{vae_forward.1} parent=0 // pred_check
    _
  $region55: #{vae_forward.1} parent=0 // pred_check_branch
    %428 = sbr.rel (0) target = $region57
  $region56: #{vae_forward.1} parent=0 // pred_region
    _
  $region57: #{vae_forward.1} parent=0 // pred_fallthru
    _

</llo_original>
